<compile_context>
chip_gen: v6e
topology: v6e:2x2x1
jax: 0.10.0
libtpu: 0.0.40
codegen_flags: <defaults>
</compile_context>

<pallas_src>
import functools

import jax
import jax.numpy as jnp
from jax.experimental import pallas as pl
from jax.experimental.pallas import tpu as pltpu

SMOOTH = 1e-08

# Tunables (safe on v5e / v6e / v7x).
_TARGET_BLOCK_BYTES = 4 * 1024 * 1024   # ~4 MiB per input block
_MAX_HW_CHUNK = 8192                    # lane-chunk cap (multiple of 128)


def _dice_kernel(p_ref, t_ref, o_ref, inter_acc, den_acc, *,
                 n_rows, n_cols, tm, hw_chunk, mask_rows, mask_cols):
    """One (tm, hw_chunk) tile. Accumulates per-row partial sums across the
    HW axis; at the last HW step writes this row-tile's dice-sum."""
    i = pl.program_id(0)   # row-tile index   (parallel)
    j = pl.program_id(1)   # HW-chunk index   (reduction, arbitrary)

    @pl.when(j == 0)
    def _():
        inter_acc[...] = jnp.zeros_like(inter_acc)
        den_acc[...] = jnp.zeros_like(den_acc)

    p = p_ref[...].astype(jnp.float32)     # (tm, hw_chunk)
    t = t_ref[...].astype(jnp.float32)

    def _accumulate(pp, tt):
        inter_acc[...] += jnp.sum(pp * tt, axis=-1, keepdims=True)   # (tm, 1)
        den_acc[...] += jnp.sum(pp + tt, axis=-1, keepdims=True)     # (tm, 1)

    if not (mask_rows or mask_cols):
        # Common case: every tile is full -> plain streaming accumulate.
        _accumulate(p, t)
    else:
        # Only boundary tiles pay for masking; interior tiles take the cheap
        # path. boundary = last row-tile (if ragged rows) or last HW-chunk
        # (if ragged cols).
        conds = []
        if mask_rows:
            conds.append(i == pl.num_programs(0) - 1)
        if mask_cols:
            conds.append(j == pl.num_programs(1) - 1)
        boundary = conds[0]
        for c in conds[1:]:
            boundary = jnp.logical_or(boundary, c)

        @pl.when(boundary)
        def _():
            mask = None
            if mask_cols:
                col = j * hw_chunk + jax.lax.broadcasted_iota(
                    jnp.int32, (1, hw_chunk), 1)
                mask = col < n_cols                      # (1, hw_chunk)
            if mask_rows:
                row = i * tm + jax.lax.broadcasted_iota(
                    jnp.int32, (tm, 1), 0)
                rmask = row < n_rows                     # (tm, 1)
                mask = rmask if mask is None else jnp.logical_and(mask, rmask)
            _accumulate(jnp.where(mask, p, 0.0), jnp.where(mask, t, 0.0))

        @pl.when(jnp.logical_not(boundary))
        def _():
            _accumulate(p, t)

    @pl.when(j == pl.num_programs(1) - 1)
    def _():
        dice = (2.0 * inter_acc[...]) / (den_acc[...] + SMOOTH)   # (tm, 1)
        if mask_rows:
            row = i * tm + jax.lax.broadcasted_iota(jnp.int32, (tm, 1), 0)
            dice = jnp.where(row < n_rows, dice, 0.0)   # don't rely on SMOOTH>0
        o_ref[...] = jnp.sum(dice).reshape(1, 1, 1)     # partial dice-sum


def _pick_hw_chunk(hw):
    """Largest multiple of 128 <= cap that divides hw; else full hw (if small)
    or the cap (ragged last chunk handled in-kernel)."""
    if hw <= _MAX_HW_CHUNK:
        return hw                              # full dim: always legal
    start = _MAX_HW_CHUNK - (_MAX_HW_CHUNK % 128)
    for d in range(start, 0, -128):
        if hw % d == 0:
            return d
    return _MAX_HW_CHUNK                       # fall back to masked last chunk


def _pick_tiles(bc, hw, itemsize):
    """Choose (tm, hw_chunk) from a VMEM byte budget, honoring (8,128) rules."""
    hw_chunk = _pick_hw_chunk(hw)
    tm = max(1, _TARGET_BLOCK_BYTES // (hw_chunk * itemsize))
    # v7x megacore: keep >= 2 row tiles so the parallel axis spans both TCs.
    if bc >= 16:
        tm = min(tm, max(8, (bc // 2 // 8) * 8))
    if tm >= bc:
        tm = bc                           # full second-last dim: always legal
    else:
        tm = max(8, (tm // 8) * 8)        # multiple of 8 for sublane tiling
        tm = min(tm, 2048)
    return int(tm), int(hw_chunk)


def dice_loss(pred, target, *, tm=None, hw_chunk=None):
    """pred, target: (B, C, H, W), any float/int dtype. Returns scalar f32."""
    assert pred.shape == target.shape
    B, C, H, W = pred.shape
    bc, hw = B * C, H * W

    # No host-side upcast: the kernel casts to f32 per tile; shipping the
    # native dtype halves HBM traffic for bf16 inputs.
    p2 = pred.reshape(bc, hw)
    t2 = target.reshape(bc, hw)

    itemsize = max(p2.dtype.itemsize, t2.dtype.itemsize)
    auto_tm, auto_hw = _pick_tiles(bc, hw, itemsize)
    if tm is None:
        tm = auto_tm
    if hw_chunk is None:
        hw_chunk = auto_hw

    n_row_tiles = pl.cdiv(bc, tm)
    n_hw_tiles = pl.cdiv(hw, hw_chunk)
    mask_rows = (bc % tm) != 0
    mask_cols = (hw % hw_chunk) != 0

    kernel = functools.partial(
        _dice_kernel, n_rows=bc, n_cols=hw, tm=tm, hw_chunk=hw_chunk,
        mask_rows=mask_rows, mask_cols=mask_cols)

    # vmem_limit sized to actual need (2 inputs x 2 buffers x block + scratch)
    # plus compiler-scratch headroom, instead of a blanket 48 MiB.
    block_bytes = tm * hw_chunk * itemsize
    vmem_need = 2 * 2 * block_bytes + 2 * tm * 4 + 4096
    vmem_limit = int(min(max(vmem_need + (16 << 20), 24 << 20), 48 << 20))

    cost = pl.CostEstimate(
        flops=4 * bc * hw,
        transcendentals=0,
        bytes_accessed=bc * hw * (p2.dtype.itemsize + t2.dtype.itemsize))

    partials = pl.pallas_call(
        kernel,
        out_shape=jax.ShapeDtypeStruct((n_row_tiles, 1, 1), jnp.float32),
        grid_spec=pltpu.PrefetchScalarGridSpec(
            num_scalar_prefetch=0,
            grid=(n_row_tiles, n_hw_tiles),
            in_specs=[
                pl.BlockSpec((tm, hw_chunk), lambda i, j: (i, j)),
                pl.BlockSpec((tm, hw_chunk), lambda i, j: (i, j)),
            ],
            out_specs=pl.BlockSpec((1, 1, 1), lambda i, j: (i, 0, 0)),
            scratch_shapes=[
                pltpu.VMEM((tm, 1), jnp.float32),   # sum(pred * target)
                pltpu.VMEM((tm, 1), jnp.float32),   # sum(pred + target)
            ],
        ),
        compiler_params=pltpu.CompilerParams(
            dimension_semantics=("parallel", "arbitrary"),
            vmem_limit_bytes=vmem_limit,
        ),
        cost_estimate=cost,
    )(p2, t2)

    # Tiny final reduction over per-row-tile partial dice-sums.
    return 1.0 - jnp.sum(partials) / jnp.float32(bc)


def _reference(pred, target):
    num = 2.0 * jnp.sum(pred * target, axis=(-2, -1))
    den = jnp.sum(pred, axis=(-2, -1)) + jnp.sum(target, axis=(-2, -1))
    return 1.0 - jnp.mean(num / (den + SMOOTH))


if __name__ == "__main__":
    key = jax.random.PRNGKey(0)
    k1, k2, k3, k4, k5, k6 = jax.random.split(key, 6)

    # Test 1: canonical small shape, single-block fast path (no masking).
    B, C, H, W = 2, 4, 16, 16
    pred = jax.nn.sigmoid(jax.random.normal(k1, (B, C, H, W), jnp.float32))
    target = (jax.random.uniform(k2, (B, C, H, W)) > 0.5).astype(jnp.float32)
    loss = dice_loss(pred, target)
    jax.block_until_ready(loss)
    ref = _reference(pred, target)
    assert jnp.allclose(loss, ref, atol=1e-6, rtol=1e-6), (loss, ref)

    # Test 2: odd shape + forced small tiles to exercise the 2-D grid and the
    # boundary-only row/col masking (interior tiles take the unmasked path).
    B2, C2, H2, W2 = 2, 5, 16, 25          # bc=10 (not /8), hw=400 (not /128)
    pred2 = jax.nn.sigmoid(jax.random.normal(k3, (B2, C2, H2, W2), jnp.float32))
    target2 = (jax.random.uniform(k4, (B2, C2, H2, W2)) > 0.5).astype(jnp.float32)
    loss2 = dice_loss(pred2, target2, tm=8, hw_chunk=128)
    jax.block_until_ready(loss2)
    ref2 = _reference(pred2, target2)
    assert jnp.allclose(loss2, ref2, atol=1e-5, rtol=1e-5), (loss2, ref2)

    # Test 3: bf16 inputs + bc>=16 so the auto-tiler produces >=2 row tiles
    # (megacore sharding path); kernel accumulates in f32.
    B3, C3, H3, W3 = 2, 8, 16, 32
    pred3 = jax.nn.sigmoid(
        jax.random.normal(k5, (B3, C3, H3, W3), jnp.float32)).astype(jnp.bfloat16)
    target3 = (jax.random.uniform(k6, (B3, C3, H3, W3)) > 0.5).astype(jnp.bfloat16)
    loss3 = dice_loss(pred3, target3)
    jax.block_until_ready(loss3)
    ref3 = _reference(pred3.astype(jnp.float32), target3.astype(jnp.float32))
    assert jnp.allclose(loss3, ref3, atol=1e-4, rtol=1e-4), (loss3, ref3)

    print("KERNEL_OK")
</pallas_src>

<mosaic_0001>
module attributes {stable_mosaic.version = 11 : i64} {
  func.func @_dice_kernel(%arg0: i32, %arg1: i32, %arg2: memref<8x256xf32, #tpu.memory_space<vmem>>, %arg3: memref<8x256xf32, #tpu.memory_space<vmem>>, %arg4: memref<1x1x1xf32, #tpu.memory_space<vmem>>, %arg5: memref<8x1xf32, #tpu.memory_space<vmem>>, %arg6: memref<8x1xf32, #tpu.memory_space<vmem>>) attributes {dimension_semantics = [#tpu.dimension_semantics<parallel>, #tpu.dimension_semantics<arbitrary>], iteration_bounds = array<i64: 1, 1>, scalar_prefetch = 0 : i64, scratch_operands = 2 : i64, tpu.core_type = #tpu.core_type<tc>, window_params = [{transform_indices = @transform_0, window_bounds = array<i64: 8, 256>}, {transform_indices = @transform_1, window_bounds = array<i64: 8, 256>}, {transform_indices = @transform_2, window_bounds = array<i64: 1, 1, 1>}]} {
    %c0_i32 = arith.constant 0 : i32
    %0 = arith.cmpi eq, %arg1, %c0_i32 : i32
    %1 = arith.extui %0 : i1 to i32
    %c0_i32_0 = arith.constant 0 : i32
    %2 = arith.cmpi ne, %1, %c0_i32_0 : i32
    scf.if %2 {
      %cst_15 = arith.constant 0.000000e+00 : f32
      %20 = vector.broadcast %cst_15 : f32 to vector<8x1xf32>
      %c0_16 = arith.constant 0 : index
      %c0_17 = arith.constant 0 : index
      %21 = vector.load %arg5[%c0_16, %c0_17] : memref<8x1xf32, #tpu.memory_space<vmem>>, vector<8x1xf32>
      tpu.vector_store %arg5[%c0_16, %c0_17], %20 {strides = array<i32>} : memref<8x1xf32, #tpu.memory_space<vmem>>, vector<8x1xf32>,
      %cst_18 = arith.constant 0.000000e+00 : f32
      %22 = vector.broadcast %cst_18 : f32 to vector<8x1xf32>
      %c0_19 = arith.constant 0 : index
      %c0_20 = arith.constant 0 : index
      %23 = vector.load %arg6[%c0_19, %c0_20] : memref<8x1xf32, #tpu.memory_space<vmem>>, vector<8x1xf32>
      tpu.vector_store %arg6[%c0_19, %c0_20], %22 {strides = array<i32>} : memref<8x1xf32, #tpu.memory_space<vmem>>, vector<8x1xf32>,
    } else {
    }
    %c0 = arith.constant 0 : index
    %c0_1 = arith.constant 0 : index
    %3 = vector.load %arg2[%c0, %c0_1] : memref<8x256xf32, #tpu.memory_space<vmem>>, vector<8x256xf32>
    %c0_2 = arith.constant 0 : index
    %c0_3 = arith.constant 0 : index
    %4 = vector.load %arg3[%c0_2, %c0_3] : memref<8x256xf32, #tpu.memory_space<vmem>>, vector<8x256xf32>
    %c0_4 = arith.constant 0 : index
    %c0_5 = arith.constant 0 : index
    %5 = vector.load %arg5[%c0_4, %c0_5] : memref<8x1xf32, #tpu.memory_space<vmem>>, vector<8x1xf32>
    %6 = arith.mulf %3, %4 : vector<8x256xf32>
    %cst = arith.constant dense<0.000000e+00> : vector<8xf32>
    %7 = vector.multi_reduction <add>, %6, %cst [1] : vector<8x256xf32> to vector<8xf32>
    %8 = vector.shape_cast %7 : vector<8xf32> to vector<8x1xf32>
    %9 = arith.addf %5, %8 : vector<8x1xf32>
    %c0_6 = arith.constant 0 : index
    %c0_7 = arith.constant 0 : index
    %10 = vector.load %arg5[%c0_6, %c0_7] : memref<8x1xf32, #tpu.memory_space<vmem>>, vector<8x1xf32>
    tpu.vector_store %arg5[%c0_6, %c0_7], %9 {strides = array<i32>} : memref<8x1xf32, #tpu.memory_space<vmem>>, vector<8x1xf32>,
    %c0_8 = arith.constant 0 : index
    %c0_9 = arith.constant 0 : index
    %11 = vector.load %arg6[%c0_8, %c0_9] : memref<8x1xf32, #tpu.memory_space<vmem>>, vector<8x1xf32>
    %12 = arith.addf %3, %4 : vector<8x256xf32>
    %cst_10 = arith.constant dense<0.000000e+00> : vector<8xf32>
    %13 = vector.multi_reduction <add>, %12, %cst_10 [1] : vector<8x256xf32> to vector<8xf32>
    %14 = vector.shape_cast %13 : vector<8xf32> to vector<8x1xf32>
    %15 = arith.addf %11, %14 : vector<8x1xf32>
    %c0_11 = arith.constant 0 : index
    %c0_12 = arith.constant 0 : index
    %16 = vector.load %arg6[%c0_11, %c0_12] : memref<8x1xf32, #tpu.memory_space<vmem>>, vector<8x1xf32>
    tpu.vector_store %arg6[%c0_11, %c0_12], %15 {strides = array<i32>} : memref<8x1xf32, #tpu.memory_space<vmem>>, vector<8x1xf32>,
    %c0_i32_13 = arith.constant 0 : i32
    %17 = arith.cmpi eq, %arg1, %c0_i32_13 : i32
    %18 = arith.extui %17 : i1 to i32
    %c0_i32_14 = arith.constant 0 : i32
    %19 = arith.cmpi ne, %18, %c0_i32_14 : i32
    scf.if %19 {
      %c0_15 = arith.constant 0 : index
      %c0_16 = arith.constant 0 : index
      %20 = vector.load %arg5[%c0_15, %c0_16] : memref<8x1xf32, #tpu.memory_space<vmem>>, vector<8x1xf32>
      %cst_17 = arith.constant 2.000000e+00 : f32
      %21 = vector.broadcast %cst_17 : f32 to vector<8x1xf32>
      %22 = arith.mulf %21, %20 : vector<8x1xf32>
      %c0_18 = arith.constant 0 : index
      %c0_19 = arith.constant 0 : index
      %23 = vector.load %arg6[%c0_18, %c0_19] : memref<8x1xf32, #tpu.memory_space<vmem>>, vector<8x1xf32>
      %cst_20 = arith.constant 9.99999993E-9 : f32
      %24 = vector.broadcast %cst_20 : f32 to vector<8x1xf32>
      %25 = arith.addf %23, %24 : vector<8x1xf32>
      %26 = arith.divf %22, %25 : vector<8x1xf32>
      %27 = vector.shape_cast %26 : vector<8x1xf32> to vector<1x8x1xf32>
      %cst_21 = arith.constant dense<0.000000e+00> : vector<1xf32>
      %28 = vector.multi_reduction <add>, %27, %cst_21 [1, 2] : vector<1x8x1xf32> to vector<1xf32>
      %29 = vector.shape_cast %28 : vector<1xf32> to vector<1x1x1xf32>
      %30 = vector.extract %29[0, 0, 0] : f32 from vector<1x1x1xf32>
      %31 = vector.broadcast %30 : f32 to vector<1x1x1xf32>
      %c0_22 = arith.constant 0 : index
      %c0_23 = arith.constant 0 : index
      %c0_24 = arith.constant 0 : index
      %32 = vector.load %arg4[%c0_22, %c0_23, %c0_24] : memref<1x1x1xf32, #tpu.memory_space<vmem>>, vector<1x1x1xf32>
      tpu.vector_store %arg4[%c0_22, %c0_23, %c0_24], %31 {strides = array<i32>} : memref<1x1x1xf32, #tpu.memory_space<vmem>>, vector<1x1x1xf32>,
    } else {
    }
    return
  }
  func.func @transform_0(%arg0: i32, %arg1: i32) -> (i32, i32) {
    %c0_i32 = arith.constant 0 : i32
    return %arg0, %arg1 : i32, i32
  }
  func.func @transform_1(%arg0: i32, %arg1: i32) -> (i32, i32) {
    %c0_i32 = arith.constant 0 : i32
    return %arg0, %arg1 : i32, i32
  }
  func.func @transform_2(%arg0: i32, %arg1: i32) -> (i32, i32, i32) {
    %c0_i32 = arith.constant 0 : i32
    %c0_i32_0 = arith.constant 0 : i32
    %c0_i32_1 = arith.constant 0 : i32
    return %arg0, %c0_i32, %c0_i32_0 : i32, i32, i32
  }
}

</mosaic_0001>

<llo_original>
// kernel: tpu_custom_call.1
$region0: #{tpu_custom_call.1}
  #allocation0 [shape = 'u32[]', space=smem, size = 0x4, offset = 0x4, fixed_abs, tag = 'smem constant byte address 0x4 - core index']
  #allocation1 [shape = 'u32[144,128]{1,0:T(1,128)}', space=vmem, size = 0x12000, scoped, tag = 'internal scratch']
  #allocation2 [shape = 'f32[8,1]{1,0:T(8,128)}', space=vmem, size = 0x1000, scoped, tag = 'scratch operand']
  #allocation3 [shape = 'f32[8,1]{1,0:T(8,128)}', space=vmem, size = 0x1000, scoped, tag = 'scratch operand']
  %s0 = inlined_call_operand.hbm [shape: f32[8,256], index: 0, kind: input, shape index: {}]
  %s1 = inlined_call_operand.hbm [shape: f32[8,256], index: 1, kind: input, shape index: {}]
  %s2 = inlined_call_operand.hbm [shape: f32[1,1,1], index: 2, kind: output, shape index: {}]
  %s3 = sld [smem:[#allocation0]]
  $region34: #{tpu_custom_call.1} parent=0
    _
  %s5 = ssub.s32 1, %s3
  %s6 = scalar_select 0, %s5, %s3
  $region1: #{tpu_custom_call.1} parent=0
    #allocation4 [shape = 'u8[8192]{0}', space=vmem, size = 0x2000, scoped, tag = 'input window, operand 0, single buffered']
    #allocation5 [shape = 's32[1]{0}', space=sflag, size = 0x4, scoped, tag = 'scoped memory for tpu_custom_call.1']
    #allocation6 [shape = 's32[1]{0}', space=sflag, size = 0x4, scoped, tag = 'scoped memory for tpu_custom_call.1']
    #allocation7 [shape = 'u8[8192]{0}', space=vmem, size = 0x2000, scoped, tag = 'input window, operand 1, single buffered']
    #allocation8 [shape = 's32[1]{0}', space=sflag, size = 0x4, scoped, tag = 'scoped memory for tpu_custom_call.1']
    #allocation9 [shape = 'u8[512]{0}', space=vmem, size = 0x400, scoped, tag = 'output window, operand 0, single buffered']
    %7 = vsyncpa [#allocation5], 0
    %8 = vsyncpa [#allocation8], 0
    %9 = vsyncpa [#allocation6], 0
    // Predicated region
    $region2: #{tpu_custom_call.1} parent=1 // pred_check
      _
    $region3: #{tpu_custom_call.1} parent=1 // pred_check_branch
      %11 = sbr.rel (0) target = $region5
    $region4: #{tpu_custom_call.1} parent=1 // pred_region
      %s13 = ssub.s32 256, 256
      %14 = vsyncadd [#allocation5], %s13
      %s16 = sshll.u32 [#allocation4], 4
      %s17 = int_to_ptr.vmem [resolvable:$true] %s16
      %19 = dma.hbm_to_vmem [thread:$0]  %s0, 256, %s17, [#allocation5]
    $region5: #{tpu_custom_call.1} parent=1 // pred_fallthru
      _
    // Predicated region
    $region6: #{tpu_custom_call.1} parent=1 // pred_check
      _
    $region7: #{tpu_custom_call.1} parent=1 // pred_check_branch
      %21 = sbr.rel (0) target = $region9
    $region8: #{tpu_custom_call.1} parent=1 // pred_region
      %s23 = ssub.s32 256, 256
      %24 = vsyncadd [#allocation8], %s23
      %s26 = sshll.u32 [#allocation7], 4
      %s27 = int_to_ptr.vmem [resolvable:$true] %s26
      %29 = dma.hbm_to_vmem [thread:$0]  %s1, 256, %s27, [#allocation8]
    $region9: #{tpu_custom_call.1} parent=1 // pred_fallthru
      _
    // Predicated region
    $region10: #{tpu_custom_call.1} parent=1 // pred_check
      _
    $region11: #{tpu_custom_call.1} parent=1 // pred_check_branch
      %31 = sbr.rel (0) target = $region13
    $region12: #{tpu_custom_call.1} parent=1 // pred_region
      %32 = dma.done [#allocation5], 256
    $region13: #{tpu_custom_call.1} parent=1 // pred_fallthru
      _
    // Predicated region
    $region14: #{tpu_custom_call.1} parent=1 // pred_check
      _
    $region15: #{tpu_custom_call.1} parent=1 // pred_check_branch
      %34 = sbr.rel (0) target = $region17
    $region16: #{tpu_custom_call.1} parent=1 // pred_region
      %35 = dma.done [#allocation8], 256
    $region17: #{tpu_custom_call.1} parent=1 // pred_fallthru
      _
    %p36 = scmp.eq.s32.totalorder 0, 0
    // Predicated region
    $region18: #{tpu_custom_call.1} parent=1 // pred_check
      %p37 = pneg %p36
    $region19: #{tpu_custom_call.1} parent=1 // pred_check_branch
      %39 = sbr.rel (%p37) target = $region21
    $region20: #{tpu_custom_call.1} parent=1 // pred_region
      %vm40 = vcmask 7168
      %41 = vst.msk [vmem:[#allocation2] sm:$0xff] %vm40, 0.0
      %42 = vst.msk [vmem:[#allocation3] sm:$0xff] %vm40, 0.0
    $region21: #{tpu_custom_call.1} parent=1 // pred_fallthru
      _
    %v43 = vld [vmem:[#allocation4] sm:$0xff]
    %v44 = vld [vmem:[#allocation4 + $0x8] sm:$0xff]
    %v45 = vld [vmem:[#allocation7] sm:$0xff]
    %v46 = vld [vmem:[#allocation7 + $0x8] sm:$0xff]
    %v47 = vld [vmem:[#allocation2] sm:$0xff]
    %v48 = vmul.f32 %v43, %v45
    %v49 = vmul.f32 %v44, %v46
    %v50 = vadd.f32 %v48, %v49
    %51 = vadd.xlane.f32.xlu0 %v50
    %v52 = vpop.xlane.xlu0 %51
    %v53 = vadd.f32 %v47, %v52
    %vm54 = vcmask 7168
    %55 = vst.msk [vmem:[#allocation2] sm:$0xff] %vm54, %v53
    %v56 = vld [vmem:[#allocation3] sm:$0xff]
    %v57 = vadd.f32 %v43, %v45
    %v58 = vadd.f32 %v44, %v46
    %v59 = vadd.f32 %v57, %v58
    %60 = vadd.xlane.f32.xlu0 %v59
    %v61 = vpop.xlane.xlu0 %60
    %v62 = vadd.f32 %v56, %v61
    %63 = vst.msk [vmem:[#allocation3] sm:$0xff] %vm54, %v62
    // Predicated region
    $region22: #{tpu_custom_call.1} parent=1 // pred_check
      %p64 = pneg %p36
    $region23: #{tpu_custom_call.1} parent=1 // pred_check_branch
      %66 = sbr.rel (%p64) target = $region25
    $region24: #{tpu_custom_call.1} parent=1 // pred_region
      %v67 = vld [vmem:[#allocation2] sm:$0xff]
      %v68 = vmul.f32 %v67, 2.0
      %v69 = vld [vmem:[#allocation3] sm:$0xff]
      %v70 = vadd.f32 %v69, 1e-08
      %v71 = vrcp.pop %v70
      %v72 = vmul.f32 %v68, %v71
      %v73 = vsel %vm54, %v72, 0.0
      %74 = vadd.xlane.f32.xlu0 %v73
      %v75 = vpop.xlane.xlu0 %74
      %v76 = vrot.slane %v75, 4
      %v77 = vadd.f32 %v75, %v76
      %v78 = vrot.slane %v77, 2
      %v79 = vadd.f32 %v77, %v78
      %v80 = vrot.slane %v79, 1
      %v81 = vadd.f32 %v79, %v80
      %s82 = vtos %v81
      %v83 = vstv %s82
      %vm84 = vcmask 0
      %85 = vst.msk [vmem:[#allocation9] sm:$0x1] %vm84, %v83
    $region25: #{tpu_custom_call.1} parent=1 // pred_fallthru
      _
    // Predicated region
    $region26: #{tpu_custom_call.1} parent=1 // pred_check
      _
    $region27: #{tpu_custom_call.1} parent=1 // pred_check_branch
      %87 = sbr.rel (0) target = $region29
    $region28: #{tpu_custom_call.1} parent=1 // pred_region
      %s89 = ssub.s32 16, 16
      %90 = vsyncadd [#allocation6], %s89
      %s92 = sshll.u32 [#allocation9], 4
      %s93 = int_to_ptr.vmem [resolvable:$true] %s92
      %95 = dma.vmem_to_hbm [thread:$0]  %s93, 16, %s2, [#allocation6]
    $region29: #{tpu_custom_call.1} parent=1 // pred_fallthru
      _
    // Predicated region
    $region30: #{tpu_custom_call.1} parent=1 // pred_check
      _
    $region31: #{tpu_custom_call.1} parent=1 // pred_check_branch
      %97 = sbr.rel (0) target = $region33
    $region32: #{tpu_custom_call.1} parent=1 // pred_region
      %98 = dma.done [#allocation6], 16
    $region33: #{tpu_custom_call.1} parent=1 // pred_fallthru
      _
    %99 = vsyncpa [#allocation5], 1
    %100 = vsyncpa [#allocation8], 1
    %101 = vsyncpa [#allocation6], 1

</llo_original>
